<compile_context>
chip_gen: v7x
topology: tpu7x:2x2x1
jax: 0.10.0
libtpu: 0.0.40
codegen_flags: <defaults>
</compile_context>

<pallas_src>
import jax
import jax.numpy as jnp
from jax import lax
from jax.experimental import pallas as pl
from jax.experimental.pallas import tpu as pltpu

N_PLAYER = 2
N_BOARD = 14
N_FEAT = N_PLAYER * (N_BOARD + 2)   # 32
N_HIDDEN = 64
LEAKY_SLOPE = 0.01                  # torch.nn.functional.leaky_relu default
MAX_TILE_B = 8192                   # batch rows per grid step for large batches


def _leaky_relu(x):
    # max(x, a*x) == leaky_relu(x) for 0 < a < 1; mul+max instead of mul+cmp+select.
    return jnp.maximum(x, LEAKY_SLOPE * x)


def _round_up(n, m):
    return ((n + m - 1) // m) * m


def value_net_kernel(x_ref, w0_ref, b0_ref, w1_ref, b1_ref, w2_ref, b2_ref, out_ref):
    # x_ref: (T, F) batch-major tile. Weights are PyTorch-layout (out, in), biases (out, 1)
    # columns, so the whole net runs feature-major: every activation is (H, T) / (1, T),
    # i.e. fully 128-lane-packed vregs and a lane-dense, unmasked output store.
    x = x_ref[...].astype(jnp.float32)                                   # (T, F)

    # Layer 0: h0 = W0 @ x^T. Contract the F axis of both operands (transposed-rhs matmul,
    # the standard attention q@k^T pattern) so x never needs transposing in HBM or VMEM.
    h = lax.dot_general(w0_ref[...], x,
                        dimension_numbers=(((1,), (1,)), ((), ())),
                        preferred_element_type=jnp.float32)              # (H, T)
    h = _leaky_relu(h + b0_ref[...])                                     # (H, T), fully packed

    # Layer 1: h1 = W1 @ h0 (plain feature-major matmul).
    h = jnp.dot(w1_ref[...], h, preferred_element_type=jnp.float32)      # (H, T)
    h = _leaky_relu(h + b1_ref[...])                                     # (H, T), fully packed

    # Value head 64->1 off the MXU: packed broadcast-multiply (VPU) by the (H, 1) weight
    # column, sublane reduction (XLU) -> result already lane-dense.
    v = jnp.sum(h * w2_ref[...], axis=0, keepdims=True) + b2_ref[...]    # (1, T)

    # Sigmoid on fully 128-lane-packed vregs (explicit exp/div keeps lowering simple).
    out_ref[...] = 1.0 / (1.0 + jnp.exp(-v))                             # (1, T)


def value_net_forward(board, params, *, max_tile_b=MAX_TILE_B, input_dtype=jnp.float32):
    """board: (B, N_PLAYER, N_BOARD+2) -> (B,) float32 win probability."""
    B = board.shape[0]
    w0, b0, w1, b1, w2, b2 = params

    # Batch-major features. Optionally ship x as bf16 to halve the dominant HBM read stream;
    # the kernel upcasts to f32 on load, so math/accuracy of the weights is unchanged.
    x = board.reshape(B, -1).astype(input_dtype)                         # (B, F)

    # Batch tile: multiple of 128 so every grid step stores a full unmasked lane-dense row.
    tile_b = min(max_tile_b, _round_up(B, 128))
    b_pad = _round_up(B, tile_b)
    if b_pad != B:
        x = jnp.pad(x, ((0, b_pad - B), (0, 0)))                         # zero rows, sliced off
    grid = (b_pad // tile_b,)

    def resident(a):
        # Constant index_map -> operand DMA'd once, VMEM-resident across all grid steps.
        return pl.BlockSpec(a.shape, lambda i: (0, 0))

    out = pl.pallas_call(
        value_net_kernel,
        out_shape=jax.ShapeDtypeStruct((1, b_pad), jnp.float32),         # lane-dense output row
        grid=grid,
        in_specs=[
            pl.BlockSpec((tile_b, N_FEAT), lambda i: (i, 0)),            # pipelined x tile
            resident(w0), resident(b0),
            resident(w1), resident(b1),
            resident(w2), resident(b2),
        ],
        out_specs=pl.BlockSpec((1, tile_b), lambda i: (0, i)),
        compiler_params=pltpu.CompilerParams(
            # Independent batch steps. On v7x, if xprof shows one TensorCore idle, switch to
            # (pltpu.CORE_PARALLEL,) to shard grid steps across both TCs.
            dimension_semantics=("parallel",),
            vmem_limit_bytes=32 * 1024 * 1024,
        ),
    )(x, w0, b0, w1, b1, w2, b2)
    return out[0, :B]                                                    # (B,)


def init_params(key):
    """Deterministic init in native PyTorch layouts: weights (out, in), biases (out, 1)."""
    k0, k1, k2, k3, k4, k5 = jax.random.split(key, 6)

    def uinit(k, shape, fan_in):
        bound = 1.0 / jnp.sqrt(fan_in)
        return jax.random.uniform(k, shape, jnp.float32, -bound, bound)

    w0 = uinit(k0, (N_HIDDEN, N_FEAT), N_FEAT)       # layer_base0.weight  (64, 32)
    b0 = uinit(k1, (N_HIDDEN, 1), N_FEAT)            # layer_base0.bias    (64, 1)
    w1 = uinit(k2, (N_HIDDEN, N_HIDDEN), N_HIDDEN)   # layer_base1.weight  (64, 64)
    b1 = uinit(k3, (N_HIDDEN, 1), N_HIDDEN)          # layer_base1.bias    (64, 1)
    w2 = uinit(k4, (N_HIDDEN, 1), N_HIDDEN)          # layer_value0.weight (as a column)
    b2 = uinit(k5, (1, 1), N_HIDDEN)                 # layer_value0.bias
    return (w0, b0, w1, b1, w2, b2)


def value_net_reference(board, params):
    """Pure-JAX, batch-major reference (independent of the kernel's feature-major math)."""
    w0, b0, w1, b1, w2, b2 = params
    x = board.reshape(board.shape[0], -1).astype(jnp.float32)

    def leaky(v):
        return jnp.where(v >= 0, v, LEAKY_SLOPE * v)

    h = leaky(x @ w0.T + b0[:, 0])
    h = leaky(h @ w1.T + b1[:, 0])
    v = h @ w2[:, 0] + b2[0, 0]
    return jax.nn.sigmoid(v)


if __name__ == "__main__":
    key = jax.random.PRNGKey(0)
    pkey, xkey1, xkey2 = jax.random.split(key, 3)
    params = init_params(pkey)

    # Small single-tile case (tile_b rounds up to 128, grid = 1).
    B = 8
    board = jax.random.uniform(xkey1, (B, N_PLAYER, N_BOARD + 2), jnp.float32)
    out = jax.block_until_ready(value_net_forward(board, params))
    ref = value_net_reference(board, params)
    assert out.shape == (B,), f"out.shape={out.shape!r}"
    assert jnp.allclose(out, ref, atol=3e-5, rtol=3e-5), "mismatch vs reference (B=8)"

    # Multi-tile case with padding (forces grid > 1 and a non-divisible batch).
    B2 = 300
    board2 = jax.random.uniform(xkey2, (B2, N_PLAYER, N_BOARD + 2), jnp.float32)
    out2 = jax.block_until_ready(value_net_forward(board2, params, max_tile_b=128))
    ref2 = value_net_reference(board2, params)
    assert out2.shape == (B2,), f"out2.shape={out2.shape!r}"
    assert jnp.allclose(out2, ref2, atol=3e-5, rtol=3e-5), "mismatch vs reference (B=300)"

    # Optional bf16 x stream (halves the HBM read of x); math stays f32 inside the kernel.
    out3 = jax.block_until_ready(
        value_net_forward(board2, params, max_tile_b=128, input_dtype=jnp.bfloat16))
    assert out3.shape == (B2,), f"out3.shape={out3.shape!r}"
    assert jnp.allclose(out3, ref2, atol=2e-2, rtol=2e-2), "mismatch vs reference (bf16 x)"

    print("KERNEL_OK")
</pallas_src>

<mosaic_0001>
module attributes {stable_mosaic.version = 11 : i64} {
  func.func @value_net_kernel(%arg0: i32, %arg1: memref<128x32xf32, #tpu.memory_space<vmem>>, %arg2: memref<64x32xf32, #tpu.memory_space<vmem>>, %arg3: memref<64x1xf32, #tpu.memory_space<vmem>>, %arg4: memref<64x64xf32, #tpu.memory_space<vmem>>, %arg5: memref<64x1xf32, #tpu.memory_space<vmem>>, %arg6: memref<64x1xf32, #tpu.memory_space<vmem>>, %arg7: memref<1x1xf32, #tpu.memory_space<vmem>>, %arg8: memref<1x128xf32, #tpu.memory_space<vmem>>) attributes {dimension_semantics = [#tpu.dimension_semantics<parallel>], iteration_bounds = array<i64: 1>, scalar_prefetch = 0 : i64, scratch_operands = 0 : i64, tpu.core_type = #tpu.core_type<tc>, window_params = [{transform_indices = @transform_0, window_bounds = array<i64: 128, 32>}, {pipeline_mode = #tpu.pipeline_mode<synchronous>, transform_indices = @transform_1, window_bounds = array<i64: 64, 32>}, {pipeline_mode = #tpu.pipeline_mode<synchronous>, transform_indices = @transform_2, window_bounds = array<i64: 64, 1>}, {pipeline_mode = #tpu.pipeline_mode<synchronous>, transform_indices = @transform_3, window_bounds = array<i64: 64, 64>}, {pipeline_mode = #tpu.pipeline_mode<synchronous>, transform_indices = @transform_4, window_bounds = array<i64: 64, 1>}, {pipeline_mode = #tpu.pipeline_mode<synchronous>, transform_indices = @transform_5, window_bounds = array<i64: 64, 1>}, {pipeline_mode = #tpu.pipeline_mode<synchronous>, transform_indices = @transform_6, window_bounds = array<i64: 1, 1>}, {transform_indices = @transform_7, window_bounds = array<i64: 1, 128>}]} {
    %c0 = arith.constant 0 : index
    %c0_0 = arith.constant 0 : index
    %0 = vector.load %arg1[%c0, %c0_0] : memref<128x32xf32, #tpu.memory_space<vmem>>, vector<128x32xf32>
    %c0_1 = arith.constant 0 : index
    %c0_2 = arith.constant 0 : index
    %1 = vector.load %arg2[%c0_1, %c0_2] : memref<64x32xf32, #tpu.memory_space<vmem>>, vector<64x32xf32>
    %cst = arith.constant dense<0.000000e+00> : vector<64x128xf32>
    %2 = tpu.matmul %1, %0, %cst {dimension_numbers = #tpu.dot_dimension_numbers<[1], [1], [0], [0], [0, 0, 1, 0], [], []>} : vector<64x32xf32>, vector<128x32xf32>, vector<64x128xf32> -> vector<64x128xf32>
    %c0_3 = arith.constant 0 : index
    %c0_4 = arith.constant 0 : index
    %3 = vector.load %arg3[%c0_3, %c0_4] : memref<64x1xf32, #tpu.memory_space<vmem>>, vector<64x1xf32>
    %4 = vector.broadcast %3 : vector<64x1xf32> to vector<64x128xf32>
    %5 = arith.addf %2, %4 : vector<64x128xf32>
    %cst_5 = arith.constant 0.00999999977 : f32
    %6 = vector.broadcast %cst_5 : f32 to vector<64x128xf32>
    %7 = arith.mulf %6, %5 : vector<64x128xf32>
    %8 = arith.maximumf %5, %7 : vector<64x128xf32>
    %c0_6 = arith.constant 0 : index
    %c0_7 = arith.constant 0 : index
    %9 = vector.load %arg4[%c0_6, %c0_7] : memref<64x64xf32, #tpu.memory_space<vmem>>, vector<64x64xf32>
    %cst_8 = arith.constant dense<0.000000e+00> : vector<64x128xf32>
    %10 = tpu.matmul %9, %8, %cst_8 {dimension_numbers = #tpu.dot_dimension_numbers<[1], [0], [0], [1], [0, 0, 1, 1], [], []>} : vector<64x64xf32>, vector<64x128xf32>, vector<64x128xf32> -> vector<64x128xf32>
    %c0_9 = arith.constant 0 : index
    %c0_10 = arith.constant 0 : index
    %11 = vector.load %arg5[%c0_9, %c0_10] : memref<64x1xf32, #tpu.memory_space<vmem>>, vector<64x1xf32>
    %12 = vector.broadcast %11 : vector<64x1xf32> to vector<64x128xf32>
    %13 = arith.addf %10, %12 : vector<64x128xf32>
    %cst_11 = arith.constant 0.00999999977 : f32
    %14 = vector.broadcast %cst_11 : f32 to vector<64x128xf32>
    %15 = arith.mulf %14, %13 : vector<64x128xf32>
    %16 = arith.maximumf %13, %15 : vector<64x128xf32>
    %c0_12 = arith.constant 0 : index
    %c0_13 = arith.constant 0 : index
    %17 = vector.load %arg6[%c0_12, %c0_13] : memref<64x1xf32, #tpu.memory_space<vmem>>, vector<64x1xf32>
    %18 = vector.broadcast %17 : vector<64x1xf32> to vector<64x128xf32>
    %19 = arith.mulf %16, %18 : vector<64x128xf32>
    %cst_14 = arith.constant dense<0.000000e+00> : vector<128xf32>
    %20 = vector.multi_reduction <add>, %19, %cst_14 [0] : vector<64x128xf32> to vector<128xf32>
    %21 = vector.shape_cast %20 : vector<128xf32> to vector<1x128xf32>
    %c0_15 = arith.constant 0 : index
    %c0_16 = arith.constant 0 : index
    %22 = vector.load %arg7[%c0_15, %c0_16] : memref<1x1xf32, #tpu.memory_space<vmem>>, vector<1x1xf32>
    %23 = vector.broadcast %22 : vector<1x1xf32> to vector<1x128xf32>
    %24 = arith.addf %21, %23 : vector<1x128xf32>
    %cst_17 = arith.constant 0.000000e+00 : f32
    %25 = vector.broadcast %cst_17 : f32 to vector<1x128xf32>
    %26 = arith.subf %25, %24 : vector<1x128xf32>
    %27 = math.exp %26 : vector<1x128xf32>
    %cst_18 = arith.constant 1.000000e+00 : f32
    %28 = vector.broadcast %cst_18 : f32 to vector<1x128xf32>
    %29 = arith.addf %28, %27 : vector<1x128xf32>
    %cst_19 = arith.constant 1.000000e+00 : f32
    %30 = vector.broadcast %cst_19 : f32 to vector<1x128xf32>
    %31 = arith.divf %30, %29 : vector<1x128xf32>
    %c0_20 = arith.constant 0 : index
    %c0_21 = arith.constant 0 : index
    %32 = vector.load %arg8[%c0_20, %c0_21] : memref<1x128xf32, #tpu.memory_space<vmem>>, vector<1x128xf32>
    tpu.vector_store %arg8[%c0_20, %c0_21], %31 {strides = array<i32>} : memref<1x128xf32, #tpu.memory_space<vmem>>, vector<1x128xf32>,
    return
  }
  func.func @transform_0(%arg0: i32) -> (i32, i32) {
    %c0_i32 = arith.constant 0 : i32
    %c0_i32_0 = arith.constant 0 : i32
    return %arg0, %c0_i32 : i32, i32
  }
  func.func @transform_1(%arg0: i32) -> (i32, i32) {
    %c0_i32 = arith.constant 0 : i32
    %c0_i32_0 = arith.constant 0 : i32
    %c0_i32_1 = arith.constant 0 : i32
    return %c0_i32, %c0_i32_0 : i32, i32
  }
  func.func @transform_2(%arg0: i32) -> (i32, i32) {
    %c0_i32 = arith.constant 0 : i32
    %c0_i32_0 = arith.constant 0 : i32
    %c0_i32_1 = arith.constant 0 : i32
    return %c0_i32, %c0_i32_0 : i32, i32
  }
  func.func @transform_3(%arg0: i32) -> (i32, i32) {
    %c0_i32 = arith.constant 0 : i32
    %c0_i32_0 = arith.constant 0 : i32
    %c0_i32_1 = arith.constant 0 : i32
    return %c0_i32, %c0_i32_0 : i32, i32
  }
  func.func @transform_4(%arg0: i32) -> (i32, i32) {
    %c0_i32 = arith.constant 0 : i32
    %c0_i32_0 = arith.constant 0 : i32
    %c0_i32_1 = arith.constant 0 : i32
    return %c0_i32, %c0_i32_0 : i32, i32
  }
  func.func @transform_5(%arg0: i32) -> (i32, i32) {
    %c0_i32 = arith.constant 0 : i32
    %c0_i32_0 = arith.constant 0 : i32
    %c0_i32_1 = arith.constant 0 : i32
    return %c0_i32, %c0_i32_0 : i32, i32
  }
  func.func @transform_6(%arg0: i32) -> (i32, i32) {
    %c0_i32 = arith.constant 0 : i32
    %c0_i32_0 = arith.constant 0 : i32
    %c0_i32_1 = arith.constant 0 : i32
    return %c0_i32, %c0_i32_0 : i32, i32
  }
  func.func @transform_7(%arg0: i32) -> (i32, i32) {
    %c0_i32 = arith.constant 0 : i32
    %c0_i32_0 = arith.constant 0 : i32
    return %c0_i32, %arg0 : i32, i32
  }
}

</mosaic_0001>

<llo_original>
// kernel: tpu_custom_call.1
$region0: #{tpu_custom_call.1}
  #allocation0 [shape = 'u32[]', space=smem, size = 0x4, offset = 0x4, fixed_abs, tag = 'smem constant byte address 0x4 - core index']
  #allocation1 [shape = 'u32[144,128]{1,0:T(1,128)}', space=vmem, size = 0x12000, scoped, tag = 'internal scratch']
  #allocation2 [shape = 'f32[1,1]{1,0:T(1,128)S(1)}', space=vmem, size = 0x200, scoped, tag = 'scoped memory for tpu_custom_call.1']
  %s0 = inlined_call_operand.vmem [shape: f32[128,32], index: 0, kind: input, shape index: {}]
  %s1 = inlined_call_operand.vmem [shape: f32[64,32], index: 1, kind: input, shape index: {}]
  %s2 = inlined_call_operand.vmem [shape: f32[64,1], index: 2, kind: input, shape index: {}]
  %s3 = inlined_call_operand.vmem [shape: f32[64,64], index: 3, kind: input, shape index: {}]
  %s4 = inlined_call_operand.vmem [shape: f32[64,1], index: 4, kind: input, shape index: {}]
  %s5 = inlined_call_operand.vmem [shape: f32[64,1], index: 5, kind: input, shape index: {}]
  %s6 = inlined_call_operand.<no memory space> [shape: f32[1,1], index: 6, kind: input, shape index: {}]
  %s7 = inlined_call_operand.hbm [shape: f32[1,128], index: 7, kind: output, shape index: {}]
  %s8 = sld [smem:[#allocation0]]
  $region38: #{tpu_custom_call.1} parent=0
    _
  %s10 = ssub.s32 1, %s8
  %s11 = scalar_select 0, %s10, %s8
  %v12 = vstv %s6
  %13 = vst [vmem:[#allocation2] sm:$0x1] %v12
  $region1: #{tpu_custom_call.1} parent=0
    #allocation3 [shape = 'u8[512]{0}', space=vmem, size = 0x400, scoped, tag = 'output window, operand 0, single buffered']
    #allocation4 [shape = 's32[1]{0}', space=sflag, size = 0x4, scoped, tag = 'scoped memory for tpu_custom_call.1']
    %14 = vsyncpa [#allocation4], 0
    // Predicated region
    $region2: #{tpu_custom_call.1} parent=1 // pred_check
      _
    $region3: #{tpu_custom_call.1} parent=1 // pred_check_branch
      %16 = sbr.rel (0) target = $region5
    $region4: #{tpu_custom_call.1} parent=1 // pred_region
      _
    $region5: #{tpu_custom_call.1} parent=1 // pred_fallthru
      _
    // Predicated region
    $region6: #{tpu_custom_call.1} parent=1 // pred_check
      _
    $region7: #{tpu_custom_call.1} parent=1 // pred_check_branch
      %18 = sbr.rel (0) target = $region9
    $region8: #{tpu_custom_call.1} parent=1 // pred_region
      _
    $region9: #{tpu_custom_call.1} parent=1 // pred_fallthru
      _
    // Predicated region
    $region10: #{tpu_custom_call.1} parent=1 // pred_check
      _
    $region11: #{tpu_custom_call.1} parent=1 // pred_check_branch
      %20 = sbr.rel (0) target = $region13
    $region12: #{tpu_custom_call.1} parent=1 // pred_region
      _
    $region13: #{tpu_custom_call.1} parent=1 // pred_fallthru
      _
    // Predicated region
    $region14: #{tpu_custom_call.1} parent=1 // pred_check
      _
    $region15: #{tpu_custom_call.1} parent=1 // pred_check_branch
      %22 = sbr.rel (0) target = $region17
    $region16: #{tpu_custom_call.1} parent=1 // pred_region
      _
    $region17: #{tpu_custom_call.1} parent=1 // pred_fallthru
      _
    // Predicated region
    $region18: #{tpu_custom_call.1} parent=1 // pred_check
      _
    $region19: #{tpu_custom_call.1} parent=1 // pred_check_branch
      %24 = sbr.rel (0) target = $region21
    $region20: #{tpu_custom_call.1} parent=1 // pred_region
      _
    $region21: #{tpu_custom_call.1} parent=1 // pred_fallthru
      _
    // Predicated region
    $region22: #{tpu_custom_call.1} parent=1 // pred_check
      _
    $region23: #{tpu_custom_call.1} parent=1 // pred_check_branch
      %26 = sbr.rel (0) target = $region25
    $region24: #{tpu_custom_call.1} parent=1 // pred_region
      _
    $region25: #{tpu_custom_call.1} parent=1 // pred_fallthru
      _
    // Predicated region
    $region26: #{tpu_custom_call.1} parent=1 // pred_check
      _
    $region27: #{tpu_custom_call.1} parent=1 // pred_check_branch
      %28 = sbr.rel (0) target = $region29
    $region28: #{tpu_custom_call.1} parent=1 // pred_region
      _
    $region29: #{tpu_custom_call.1} parent=1 // pred_fallthru
      _
    %v29 = vld [vmem:[%s0] sm:$0xff]
    %v30 = vld [vmem:[%s0 + $0x8] sm:$0xff]
    %v31 = vld [vmem:[%s0 + $0x10] sm:$0xff]
    %v32 = vld [vmem:[%s0 + $0x18] sm:$0xff]
    %v33 = vld [vmem:[%s0 + $0x20] sm:$0xff]
    %v34 = vld [vmem:[%s0 + $0x28] sm:$0xff]
    %v35 = vld [vmem:[%s0 + $0x30] sm:$0xff]
    %v36 = vld [vmem:[%s0 + $0x38] sm:$0xff]
    %v37 = vld [vmem:[%s0 + $0x40] sm:$0xff]
    %v38 = vld [vmem:[%s0 + $0x48] sm:$0xff]
    %v39 = vld [vmem:[%s0 + $0x50] sm:$0xff]
    %v40 = vld [vmem:[%s0 + $0x58] sm:$0xff]
    %v41 = vld [vmem:[%s0 + $0x60] sm:$0xff]
    %v42 = vld [vmem:[%s0 + $0x68] sm:$0xff]
    %v43 = vld [vmem:[%s0 + $0x70] sm:$0xff]
    %v44 = vld [vmem:[%s0 + $0x78] sm:$0xff]
    %v45 = vld [vmem:[%s1] sm:$0xff]
    %v46 = vld [vmem:[%s1 + $0x8] sm:$0xff]
    %v47 = vld [vmem:[%s1 + $0x10] sm:$0xff]
    %v48 = vld [vmem:[%s1 + $0x18] sm:$0xff]
    %v49 = vld [vmem:[%s1 + $0x20] sm:$0xff]
    %v50 = vld [vmem:[%s1 + $0x28] sm:$0xff]
    %v51 = vld [vmem:[%s1 + $0x30] sm:$0xff]
    %v52 = vld [vmem:[%s1 + $0x38] sm:$0xff]
    %v53 = vld [vmem:[%s2] sm:$0xff]
    %v54 = vld [vmem:[%s2 + $0x8] sm:$0xff]
    %v55 = vld [vmem:[%s2 + $0x10] sm:$0xff]
    %v56 = vld [vmem:[%s2 + $0x18] sm:$0xff]
    %v57 = vld [vmem:[%s2 + $0x20] sm:$0xff]
    %v58 = vld [vmem:[%s2 + $0x28] sm:$0xff]
    %v59 = vld [vmem:[%s2 + $0x30] sm:$0xff]
    %v60 = vld [vmem:[%s2 + $0x38] sm:$0xff]
    %62 = vset.pattern.permute.xlu0 0
    %63 = vperm.xlu0 %62, %v53
    %v64 = vpop.permute.xlu0 %63
    %67 = vset.pattern.permute.xlu0 0
    %68 = vperm.xlu0 %67, %v54
    %v69 = vpop.permute.xlu0 %68
    %72 = vset.pattern.permute.xlu0 0
    %73 = vperm.xlu0 %72, %v55
    %v74 = vpop.permute.xlu0 %73
    %77 = vset.pattern.permute.xlu0 0
    %78 = vperm.xlu0 %77, %v56
    %v79 = vpop.permute.xlu0 %78
    %82 = vset.pattern.permute.xlu0 0
    %83 = vperm.xlu0 %82, %v57
    %v84 = vpop.permute.xlu0 %83
    %87 = vset.pattern.permute.xlu0 0
    %88 = vperm.xlu0 %87, %v58
    %v89 = vpop.permute.xlu0 %88
    %92 = vset.pattern.permute.xlu0 0
    %93 = vperm.xlu0 %92, %v59
    %v94 = vpop.permute.xlu0 %93
    %97 = vset.pattern.permute.xlu0 0
    %98 = vperm.xlu0 %97, %v60
    %v99 = vpop.permute.xlu0 %98
    %vm101 = vcmask 261120
    %v103 = vsel %vm101, %v45, 0
    %v106 = vsel %vm101, %v46, 0
    %v109 = vsel %vm101, %v47, 0
    %v112 = vsel %vm101, %v48, 0
    %v115 = vsel %vm101, %v49, 0
    %v118 = vsel %vm101, %v50, 0
    %v121 = vsel %vm101, %v51, 0
    %v124 = vsel %vm101, %v52, 0
    %v127 = vsel %vm101, %v29, 0
    %v130 = vsel %vm101, %v30, 0
    %v133 = vsel %vm101, %v31, 0
    %v136 = vsel %vm101, %v32, 0
    %v139 = vsel %vm101, %v33, 0
    %v142 = vsel %vm101, %v34, 0
    %v145 = vsel %vm101, %v35, 0
    %v148 = vsel %vm101, %v36, 0
    %v151 = vsel %vm101, %v37, 0
    %v154 = vsel %vm101, %v38, 0
    %v157 = vsel %vm101, %v39, 0
    %v160 = vsel %vm101, %v40, 0
    %v163 = vsel %vm101, %v41, 0
    %v166 = vsel %vm101, %v42, 0
    %v169 = vsel %vm101, %v43, 0
    %v172 = vsel %vm101, %v44, 0
    %174 = vmatprep.subr.mxu0 0.0
    %175 = vmatpush1.xpose.msra.mxu0 %v127
    %176 = vmatprep.subr.mxu0 0.0
    %177 = vmatpush1.xpose.msra.mxu0 %v130
    %178 = vmatprep.subr.mxu0 0.0
    %179 = vmatpush1.xpose.msra.mxu0 %v133
    %180 = vmatprep.subr.mxu0 0.0
    %181 = vmatpush1.xpose.msra.mxu0 %v136
    %182 = vmatprep.subr.mxu0 0.0
    %183 = vmatpush1.xpose.msra.mxu0 %v139
    %184 = vmatprep.subr.mxu0 0.0
    %185 = vmatpush1.xpose.msra.mxu0 %v142
    %186 = vmatprep.subr.mxu0 0.0
    %187 = vmatpush1.xpose.msra.mxu0 %v145
    %188 = vmatprep.subr.mxu0 0.0
    %189 = vmatpush1.xpose.msra.mxu0 %v148
    %190 = vmatprep.subr.mxu0 0.0
    %191 = vmatpush1.xpose.msra.mxu0 %v151
    %192 = vmatprep.subr.mxu0 0.0
    %193 = vmatpush1.xpose.msra.mxu0 %v154
    %194 = vmatprep.subr.mxu0 0.0
    %195 = vmatpush1.xpose.msra.mxu0 %v157
    %196 = vmatprep.subr.mxu0 0.0
    %197 = vmatpush1.xpose.msra.mxu0 %v160
    %198 = vmatprep.subr.mxu0 0.0
    %199 = vmatpush1.xpose.msra.mxu0 %v163
    %200 = vmatprep.subr.mxu0 0.0
    %201 = vmatpush1.xpose.msra.mxu0 %v166
    %202 = vmatprep.subr.mxu0 0.0
    %203 = vmatpush1.xpose.msra.mxu0 %v169
    %204 = vmatprep.subr.mxu0 0.0
    %205 = vmatpush1.xpose.msra.mxu0 %v172
    %206 = vmatprep.subr.mxu0 0.0
    %207 = vmatpush1.xpose.msra.mxu0 0.0
    %208 = vmatprep.subr.mxu0 0.0
    %209 = vmatpush1.xpose.msra.mxu0 0.0
    %210 = vmatprep.subr.mxu0 0.0
    %211 = vmatpush1.xpose.msra.mxu0 0.0
    %212 = vmatprep.subr.mxu0 0.0
    %213 = vmatpush1.xpose.msra.mxu0 0.0
    %214 = vmatprep.subr.mxu0 0.0
    %215 = vmatpush1.xpose.msra.mxu0 0.0
    %216 = vmatprep.subr.mxu0 0.0
    %217 = vmatpush1.xpose.msra.mxu0 0.0
    %218 = vmatprep.subr.mxu0 0.0
    %219 = vmatpush1.xpose.msra.mxu0 0.0
    %220 = vmatprep.subr.mxu0 0.0
    %221 = vmatpush1.xpose.msra.mxu0 0.0
    %222 = vmatprep.subr.mxu0 0.0
    %223 = vmatpush1.xpose.msra.mxu0 0.0
    %224 = vmatprep.subr.mxu0 0.0
    %225 = vmatpush1.xpose.msra.mxu0 0.0
    %226 = vmatprep.subr.mxu0 0.0
    %227 = vmatpush1.xpose.msra.mxu0 0.0
    %228 = vmatprep.subr.mxu0 0.0
    %229 = vmatpush1.xpose.msra.mxu0 0.0
    %230 = vmatprep.subr.mxu0 0.0
    %231 = vmatpush1.xpose.msra.mxu0 0.0
    %232 = vmatprep.subr.mxu0 0.0
    %233 = vmatpush1.xpose.msra.mxu0 0.0
    %234 = vmatprep.subr.mxu0 0.0
    %235 = vmatpush1.xpose.msra.mxu0 0.0
    %236 = vmatprep.subr.mxu0 0.0
    %237 = vmatpush1.xpose.msra.mxu0 0.0
    %238 = vmatprep.mubr.f32.mxu0 0.0
    %239 = vmatmul.mubr.f32.gmra.mrb[0].mxu0 %v103
    %v240 = vpop.f32.mrb[0].mxu0
    %v241 = vadd.f32 %v64, %v240
    %v242 = vpop.f32.mrb[0].mxu0
    %243 = vmatprep.mubr.f32.mxu0 0.0
    %244 = vmatmul.mubr.f32.gmra.mrb[0].mxu0 %v106
    %v245 = vpop.f32.mrb[0].mxu0
    %v246 = vadd.f32 %v69, %v245
    %v247 = vpop.f32.mrb[0].mxu0
    %248 = vmatprep.mubr.f32.mxu0 0.0
    %249 = vmatmul.mubr.f32.gmra.mrb[0].mxu0 %v109
    %v250 = vpop.f32.mrb[0].mxu0
    %v251 = vadd.f32 %v74, %v250
    %v252 = vpop.f32.mrb[0].mxu0
    %253 = vmatprep.mubr.f32.mxu0 0.0
    %254 = vmatmul.mubr.f32.gmra.mrb[0].mxu0 %v112
    %v255 = vpop.f32.mrb[0].mxu0
    %v256 = vadd.f32 %v79, %v255
    %v257 = vpop.f32.mrb[0].mxu0
    %258 = vmatprep.mubr.f32.mxu0 0.0
    %259 = vmatmul.mubr.f32.gmra.mrb[0].mxu0 %v115
    %v260 = vpop.f32.mrb[0].mxu0
    %v261 = vadd.f32 %v84, %v260
    %v262 = vpop.f32.mrb[0].mxu0
    %263 = vmatprep.mubr.f32.mxu0 0.0
    %264 = vmatmul.mubr.f32.gmra.mrb[0].mxu0 %v118
    %v265 = vpop.f32.mrb[0].mxu0
    %v266 = vadd.f32 %v89, %v265
    %v267 = vpop.f32.mrb[0].mxu0
    %268 = vmatprep.mubr.f32.mxu0 0.0
    %269 = vmatmul.mubr.f32.gmra.mrb[0].mxu0 %v121
    %v270 = vpop.f32.mrb[0].mxu0
    %v271 = vadd.f32 %v94, %v270
    %v272 = vpop.f32.mrb[0].mxu0
    %273 = vmatprep.mubr.f32.mxu0 0.0
    %274 = vmatmul.mubr.f32.gmra.mrb[0].mxu0 %v124
    %v275 = vpop.f32.mrb[0].mxu0
    %v276 = vadd.f32 %v99, %v275
    %v277 = vpop.f32.mrb[0].mxu0
    %278 = vdwg.mxu0
    %v279 = vmul.f32 %v241, 0.01
    %v280 = vmul.f32 %v246, 0.01
    %v281 = vmul.f32 %v251, 0.01
    %v282 = vmul.f32 %v256, 0.01
    %v283 = vmul.f32 %v261, 0.01
    %v284 = vmul.f32 %v266, 0.01
    %v285 = vmul.f32 %v271, 0.01
    %v286 = vmul.f32 %v276, 0.01
    %v287 = vmax.f32 %v241, %v279
    %v288 = vmax.f32 %v246, %v280
    %v289 = vmax.f32 %v251, %v281
    %v290 = vmax.f32 %v256, %v282
    %v291 = vmax.f32 %v261, %v283
    %v292 = vmax.f32 %v266, %v284
    %v293 = vmax.f32 %v271, %v285
    %v294 = vmax.f32 %v276, %v286
    %v295 = vld [vmem:[%s3] sm:$0xff]
    %v296 = vld [vmem:[%s3 + $0x8] sm:$0xff]
    %v297 = vld [vmem:[%s3 + $0x10] sm:$0xff]
    %v298 = vld [vmem:[%s3 + $0x18] sm:$0xff]
    %v299 = vld [vmem:[%s3 + $0x20] sm:$0xff]
    %v300 = vld [vmem:[%s3 + $0x28] sm:$0xff]
    %v301 = vld [vmem:[%s3 + $0x30] sm:$0xff]
    %v302 = vld [vmem:[%s3 + $0x38] sm:$0xff]
    %v303 = vld [vmem:[%s4] sm:$0xff]
    %v304 = vld [vmem:[%s4 + $0x8] sm:$0xff]
    %v305 = vld [vmem:[%s4 + $0x10] sm:$0xff]
    %v306 = vld [vmem:[%s4 + $0x18] sm:$0xff]
    %v307 = vld [vmem:[%s4 + $0x20] sm:$0xff]
    %v308 = vld [vmem:[%s4 + $0x28] sm:$0xff]
    %v309 = vld [vmem:[%s4 + $0x30] sm:$0xff]
    %v310 = vld [vmem:[%s4 + $0x38] sm:$0xff]
    %312 = vset.pattern.permute.xlu0 0
    %313 = vperm.xlu0 %312, %v303
    %v314 = vpop.permute.xlu0 %313
    %317 = vset.pattern.permute.xlu0 0
    %318 = vperm.xlu0 %317, %v304
    %v319 = vpop.permute.xlu0 %318
    %322 = vset.pattern.permute.xlu0 0
    %323 = vperm.xlu0 %322, %v305
    %v324 = vpop.permute.xlu0 %323
    %327 = vset.pattern.permute.xlu0 0
    %328 = vperm.xlu0 %327, %v306
    %v329 = vpop.permute.xlu0 %328
    %332 = vset.pattern.permute.xlu0 0
    %333 = vperm.xlu0 %332, %v307
    %v334 = vpop.permute.xlu0 %333
    %337 = vset.pattern.permute.xlu0 0
    %338 = vperm.xlu0 %337, %v308
    %v339 = vpop.permute.xlu0 %338
    %342 = vset.pattern.permute.xlu0 0
    %343 = vperm.xlu0 %342, %v309
    %v344 = vpop.permute.xlu0 %343
    %347 = vset.pattern.permute.xlu0 0
    %348 = vperm.xlu0 %347, %v310
    %v349 = vpop.permute.xlu0 %348
    %vm351 = vcmask 523264
    %v353 = vsel %vm351, %v295, 0
    %v356 = vsel %vm351, %v296, 0
    %v359 = vsel %vm351, %v297, 0
    %v362 = vsel %vm351, %v298, 0
    %v365 = vsel %vm351, %v299, 0
    %v368 = vsel %vm351, %v300, 0
    %v371 = vsel %vm351, %v301, 0
    %v374 = vsel %vm351, %v302, 0
    %376 = vmatprep.subr.mxu0 0.0
    %377 = vmatpush1.msra.mxu0 %v287
    %378 = vmatprep.subr.mxu0 0.0
    %379 = vmatpush1.msra.mxu0 %v288
    %380 = vmatprep.subr.mxu0 0.0
    %381 = vmatpush1.msra.mxu0 %v289
    %382 = vmatprep.subr.mxu0 0.0
    %383 = vmatpush1.msra.mxu0 %v290
    %384 = vmatprep.subr.mxu0 0.0
    %385 = vmatpush1.msra.mxu0 %v291
    %386 = vmatprep.subr.mxu0 0.0
    %387 = vmatpush1.msra.mxu0 %v292
    %388 = vmatprep.subr.mxu0 0.0
    %389 = vmatpush1.msra.mxu0 %v293
    %390 = vmatprep.subr.mxu0 0.0
    %391 = vmatpush1.msra.mxu0 %v294
    %392 = vmatprep.subr.mxu0 0.0
    %393 = vmatpush1.msra.mxu0 0.0
    %394 = vmatprep.subr.mxu0 0.0
    %395 = vmatpush1.msra.mxu0 0.0
    %396 = vmatprep.subr.mxu0 0.0
    %397 = vmatpush1.msra.mxu0 0.0
    %398 = vmatprep.subr.mxu0 0.0
    %399 = vmatpush1.msra.mxu0 0.0
    %400 = vmatprep.subr.mxu0 0.0
    %401 = vmatpush1.msra.mxu0 0.0
    %402 = vmatprep.subr.mxu0 0.0
    %403 = vmatpush1.msra.mxu0 0.0
    %404 = vmatprep.subr.mxu0 0.0
    %405 = vmatpush1.msra.mxu0 0.0
    %406 = vmatprep.subr.mxu0 0.0
    %407 = vmatpush1.msra.mxu0 0.0
    %408 = vmatprep.subr.mxu0 0.0
    %409 = vmatpush1.msra.mxu0 0.0
    %410 = vmatprep.subr.mxu0 0.0
    %411 = vmatpush1.msra.mxu0 0.0
    %412 = vmatprep.subr.mxu0 0.0
    %413 = vmatpush1.msra.mxu0 0.0
    %414 = vmatprep.subr.mxu0 0.0
    %415 = vmatpush1.msra.mxu0 0.0
    %416 = vmatprep.subr.mxu0 0.0
    %417 = vmatpush1.msra.mxu0 0.0
    %418 = vmatprep.subr.mxu0 0.0
    %419 = vmatpush1.msra.mxu0 0.0
    %420 = vmatprep.subr.mxu0 0.0
    %421 = vmatpush1.msra.mxu0 0.0
    %422 = vmatprep.subr.mxu0 0.0
    %423 = vmatpush1.msra.mxu0 0.0
    %424 = vmatprep.subr.mxu0 0.0
    %425 = vmatpush1.msra.mxu0 0.0
    %426 = vmatprep.subr.mxu0 0.0
    %427 = vmatpush1.msra.mxu0 0.0
    %428 = vmatprep.subr.mxu0 0.0
    %429 = vmatpush1.msra.mxu0 0.0
    %430 = vmatprep.subr.mxu0 0.0
    %431 = vmatpush1.msra.mxu0 0.0
    %432 = vmatprep.subr.mxu0 0.0
    %433 = vmatpush1.msra.mxu0 0.0
    %434 = vmatprep.subr.mxu0 0.0
    %435 = vmatpush1.msra.mxu0 0.0
    %436 = vmatprep.subr.mxu0 0.0
    %437 = vmatpush1.msra.mxu0 0.0
    %438 = vmatprep.subr.mxu0 0.0
    %439 = vmatpush1.msra.mxu0 0.0
    %440 = vmatprep.mubr.f32.mxu0 0.0
    %441 = vmatmul.mubr.f32.gmra.mrb[0].mxu0 %v353
    %v442 = vpop.f32.mrb[0].mxu0
    %v443 = vadd.f32 %v314, %v442
    %v444 = vpop.f32.mrb[0].mxu0
    %445 = vmatprep.mubr.f32.mxu0 0.0
    %446 = vmatmul.mubr.f32.gmra.mrb[0].mxu0 %v356
    %v447 = vpop.f32.mrb[0].mxu0
    %v448 = vadd.f32 %v319, %v447
    %v449 = vpop.f32.mrb[0].mxu0
    %450 = vmatprep.mubr.f32.mxu0 0.0
    %451 = vmatmul.mubr.f32.gmra.mrb[0].mxu0 %v359
    %v452 = vpop.f32.mrb[0].mxu0
    %v453 = vadd.f32 %v324, %v452
    %v454 = vpop.f32.mrb[0].mxu0
    %455 = vmatprep.mubr.f32.mxu0 0.0
    %456 = vmatmul.mubr.f32.gmra.mrb[0].mxu0 %v362
    %v457 = vpop.f32.mrb[0].mxu0
    %v458 = vadd.f32 %v329, %v457
    %v459 = vpop.f32.mrb[0].mxu0
    %460 = vmatprep.mubr.f32.mxu0 0.0
    %461 = vmatmul.mubr.f32.gmra.mrb[0].mxu0 %v365
    %v462 = vpop.f32.mrb[0].mxu0
    %v463 = vadd.f32 %v334, %v462
    %v464 = vpop.f32.mrb[0].mxu0
    %465 = vmatprep.mubr.f32.mxu0 0.0
    %466 = vmatmul.mubr.f32.gmra.mrb[0].mxu0 %v368
    %v467 = vpop.f32.mrb[0].mxu0
    %v468 = vadd.f32 %v339, %v467
    %v469 = vpop.f32.mrb[0].mxu0
    %470 = vmatprep.mubr.f32.mxu0 0.0
    %471 = vmatmul.mubr.f32.gmra.mrb[0].mxu0 %v371
    %v472 = vpop.f32.mrb[0].mxu0
    %v473 = vadd.f32 %v344, %v472
    %v474 = vpop.f32.mrb[0].mxu0
    %475 = vmatprep.mubr.f32.mxu0 0.0
    %476 = vmatmul.mubr.f32.gmra.mrb[0].mxu0 %v374
    %v477 = vpop.f32.mrb[0].mxu0
    %v478 = vadd.f32 %v349, %v477
    %v479 = vpop.f32.mrb[0].mxu0
    %480 = vdwg.mxu0
    %v481 = vmul.f32 %v443, 0.01
    %v482 = vmul.f32 %v448, 0.01
    %v483 = vmul.f32 %v453, 0.01
    %v484 = vmul.f32 %v458, 0.01
    %v485 = vmul.f32 %v463, 0.01
    %v486 = vmul.f32 %v468, 0.01
    %v487 = vmul.f32 %v473, 0.01
    %v488 = vmul.f32 %v478, 0.01
    %v489 = vmax.f32 %v443, %v481
    %v490 = vmax.f32 %v448, %v482
    %v491 = vmax.f32 %v453, %v483
    %v492 = vmax.f32 %v458, %v484
    %v493 = vmax.f32 %v463, %v485
    %v494 = vmax.f32 %v468, %v486
    %v495 = vmax.f32 %v473, %v487
    %v496 = vmax.f32 %v478, %v488
    %v497 = vld [vmem:[%s5] sm:$0xff]
    %v498 = vld [vmem:[%s5 + $0x8] sm:$0xff]
    %v499 = vld [vmem:[%s5 + $0x10] sm:$0xff]
    %v500 = vld [vmem:[%s5 + $0x18] sm:$0xff]
    %v501 = vld [vmem:[%s5 + $0x20] sm:$0xff]
    %v502 = vld [vmem:[%s5 + $0x28] sm:$0xff]
    %v503 = vld [vmem:[%s5 + $0x30] sm:$0xff]
    %v504 = vld [vmem:[%s5 + $0x38] sm:$0xff]
    %506 = vset.pattern.permute.xlu0 0
    %507 = vperm.xlu0 %506, %v497
    %v508 = vpop.permute.xlu0 %507
    %511 = vset.pattern.permute.xlu0 0
    %512 = vperm.xlu0 %511, %v498
    %v513 = vpop.permute.xlu0 %512
    %516 = vset.pattern.permute.xlu0 0
    %517 = vperm.xlu0 %516, %v499
    %v518 = vpop.permute.xlu0 %517
    %521 = vset.pattern.permute.xlu0 0
    %522 = vperm.xlu0 %521, %v500
    %v523 = vpop.permute.xlu0 %522
    %526 = vset.pattern.permute.xlu0 0
    %527 = vperm.xlu0 %526, %v501
    %v528 = vpop.permute.xlu0 %527
    %531 = vset.pattern.permute.xlu0 0
    %532 = vperm.xlu0 %531, %v502
    %v533 = vpop.permute.xlu0 %532
    %536 = vset.pattern.permute.xlu0 0
    %537 = vperm.xlu0 %536, %v503
    %v538 = vpop.permute.xlu0 %537
    %541 = vset.pattern.permute.xlu0 0
    %542 = vperm.xlu0 %541, %v504
    %v543 = vpop.permute.xlu0 %542
    %v545 = vmul.f32 %v489, %v508
    %v546 = vmul.f32 %v490, %v513
    %v547 = vmul.f32 %v491, %v518
    %v548 = vmul.f32 %v492, %v523
    %v549 = vmul.f32 %v493, %v528
    %v550 = vmul.f32 %v494, %v533
    %v551 = vmul.f32 %v495, %v538
    %v552 = vmul.f32 %v496, %v543
    %v553 = vadd.f32 %v545, %v546
    %v554 = vadd.f32 %v553, %v547
    %v555 = vadd.f32 %v554, %v548
    %v556 = vadd.f32 %v555, %v549
    %v557 = vadd.f32 %v556, %v550
    %v558 = vadd.f32 %v557, %v551
    %v559 = vadd.f32 %v558, %v552
    %v560 = vrot.slane %v559, 4
    %v561 = vadd.f32 %v559, %v560
    %v562 = vrot.slane %v561, 2
    %v563 = vadd.f32 %v561, %v562
    %v564 = vrot.slane %v563, 1
    %v565 = vadd.f32 %v563, %v564
    %v566 = vld [vmem:[#allocation2] sm:$0x1]
    %568 = vset.pattern.permute.xlu0 0
    %569 = vperm.xlu0 %568, %v566
    %v570 = vpop.permute.xlu0 %569
    %v572 = vlaneseq
    %v573 = vshrl.u32 %v572, 7
    %v574 = vsub.s32 0, %v573
    %v575 = vrot.slane %v570, %v574
    %v576 = vadd.f32 %v565, %v575
    %v577 = vsub.f32 0.0, %v576
    %v578 = vmul.f32 %v577, 1.442695
    %v579 = vpow.pop %v578
    %v580 = vadd.f32 %v579, 1.0
    %v581 = vrcp.pop %v580
    %v582 = vmul.f32 1.0, %v581
    %583 = vst [vmem:[#allocation3] sm:$0x1] %v582
    // Predicated region
    $region30: #{tpu_custom_call.1} parent=1 // pred_check
      _
    $region31: #{tpu_custom_call.1} parent=1 // pred_check_branch
      %585 = sbr.rel (0) target = $region33
    $region32: #{tpu_custom_call.1} parent=1 // pred_region
      %s587 = ssub.s32 16, 16
      %588 = vsyncadd [#allocation4], %s587
      %s590 = sshll.u32 [#allocation3], 4
      %s591 = int_to_ptr.vmem [resolvable:$true] %s590
      %593 = dma.vmem_to_hbm [thread:$0]  %s591, 16, %s7, [#allocation4]
    $region33: #{tpu_custom_call.1} parent=1 // pred_fallthru
      _
    // Predicated region
    $region34: #{tpu_custom_call.1} parent=1 // pred_check
      _
    $region35: #{tpu_custom_call.1} parent=1 // pred_check_branch
      %595 = sbr.rel (0) target = $region37
    $region36: #{tpu_custom_call.1} parent=1 // pred_region
      %596 = dma.done [#allocation4], 16
    $region37: #{tpu_custom_call.1} parent=1 // pred_fallthru
      _
    %597 = vsyncpa [#allocation4], 1

</llo_original>
